<compile_context>
chip_gen: v7x
topology: tpu7x:2x2x1
jax: 0.10.0
libtpu: 0.0.40
codegen_flags: <defaults>
</compile_context>

<pallas_src>
import functools

import jax
import jax.numpy as jnp
import numpy as np
from jax.experimental import pallas as pl
from jax.experimental.pallas import tpu as pltpu


def _round_up(x: int, m: int) -> int:
    return ((x + m - 1) // m) * m


def _cdiv(a: int, b: int) -> int:
    return -(-a // b)


def _mlp_kernel(x_ref, w1_ref, b1_ref, w2_ref, b2_ref, w3_ref, b3_ref, o_ref,
                *, mxu_dtype):
    """One batch tile. x_ref: (TR, 104) f32 — 8 batch rows packed per sublane row.

    Weights are block-diagonal (kron(I8, W)) so each packed group of 13 lanes is
    an independent batch element; biases are tiled 8x along lanes. All dots
    accumulate in f32; operands are optionally cast to bf16 (mxu_dtype).
    """
    def cast(v):
        return v.astype(mxu_dtype) if v.dtype != mxu_dtype else v

    # Layer 1: (TR,104) @ (104,80) -> (TR,80)
    h1 = jnp.dot(cast(x_ref[...]), w1_ref[...], preferred_element_type=jnp.float32)
    h1 = jnp.maximum(h1 + b1_ref[...], 0.0)

    # Layer 2: (TR,80) @ (80,64) -> (TR,64)
    h2 = jnp.dot(cast(h1), w2_ref[...], preferred_element_type=jnp.float32)
    h2 = jnp.maximum(h2 + b2_ref[...], 0.0)

    # Layer 3: (TR,64) @ (64,8) -> (TR,8)   (8 lanes = 8 packed batch outputs)
    o = jnp.dot(cast(h2), w3_ref[...], preferred_element_type=jnp.float32)
    o_ref[...] = o + b3_ref[...]


@functools.partial(jax.jit, static_argnames=("tile_batch", "use_bf16_mxu"))
def my_model_forward(x, params, *, tile_batch: int = 32768, use_bf16_mxu: bool = True):
    """x: (N, 13) float32 -> (N, 1) float32.

    tile_batch: batch elements per grid step (rounded up to a multiple of 1024 /
    128 lanes).  32K is safe on every generation with the 48 MiB VMEM limit set
    below; on v6e/v7x it can be raised to ~64-128K (raise vmem_limit_bytes too).
    use_bf16_mxu: cast matmul operands to bf16 (f32 accumulation) so the MXU
    streaming stays under the HBM roofline; set False for exact-f32 numerics.
    """
    w1, b1, w2, b2, w3, b3 = params
    x = x.astype(jnp.float32)
    n = x.shape[0]
    assert x.shape[1] == 13

    # --- pack 8 batch rows per sublane row: (n,13) -> (n/8, 104).
    # Row-major-compatible reshape => free (no HBM transpose pass). Pad to a
    # multiple of 8 rows only when needed.
    n8 = _round_up(n, 8)
    if n8 != n:
        x = jnp.pad(x, ((0, n8 - n), (0, 0)))
    nr = n8 // 8
    xp = x.reshape(nr, 8 * 13)                       # (nr, 104)

    # --- block-diagonal weights / lane-tiled biases (tiny, built once per call).
    f32 = jnp.float32
    mxu_dtype = jnp.bfloat16 if use_bf16_mxu else jnp.float32
    eye8 = jnp.eye(8, dtype=f32)
    w1p = jnp.kron(eye8, w1.astype(f32)).astype(mxu_dtype)   # (104, 80)
    w2p = jnp.kron(eye8, w2.astype(f32)).astype(mxu_dtype)   # (80, 64)
    w3p = jnp.kron(eye8, w3.astype(f32)).astype(mxu_dtype)   # (64, 8)
    b1p = jnp.tile(b1.astype(f32), (1, 8))                   # (1, 80)
    b2p = jnp.tile(b2.astype(f32), (1, 8))                   # (1, 64)
    b3p = jnp.tile(b3.astype(f32), (1, 8))                    # (1, 8)

    # --- batch tile in packed rows (8 batch elements / row).
    # cap_rows: user tile rounded to 128 lanes (guards non-128-multiple values).
    # steps_rows: shrink tile so large N keeps ~8 grid steps (v7x 2-TC sharding),
    # but never below 128 rows (1024 elements) to keep per-step DMA meaningful.
    cap_rows = _round_up(max(int(tile_batch), 128), 1024) // 8
    steps_rows = max(128, _round_up(_cdiv(nr, 8), 8))
    tile_rows = min(cap_rows, steps_rows)
    if tile_rows >= nr:
        tile_rows = nr                                # single full-extent block
    grid = (_cdiv(nr, tile_rows),)                    # ragged last block is OK

    kernel = functools.partial(_mlp_kernel, mxu_dtype=mxu_dtype)

    out = pl.pallas_call(
        kernel,
        out_shape=jax.ShapeDtypeStruct((nr, 8), jnp.float32),
        grid=grid,
        in_specs=[
            # Activations: one contiguous, lane-dense batch tile per grid step.
            pl.BlockSpec((tile_rows, 104), lambda i: (i, 0)),
            # Weights / biases: constant index_map -> VMEM-resident across steps.
            pl.BlockSpec((104, 80), lambda i: (0, 0)),
            pl.BlockSpec((1, 80), lambda i: (0, 0)),
            pl.BlockSpec((80, 64), lambda i: (0, 0)),
            pl.BlockSpec((1, 64), lambda i: (0, 0)),
            pl.BlockSpec((64, 8), lambda i: (0, 0)),
            pl.BlockSpec((1, 8), lambda i: (0, 0)),
        ],
        out_specs=pl.BlockSpec((tile_rows, 8), lambda i: (i, 0)),
        compiler_params=pltpu.CompilerParams(
            dimension_semantics=("parallel",),        # shard batch tiles across TCs
            vmem_limit_bytes=48 * 1024 * 1024,
        ),
        cost_estimate=pl.CostEstimate(
            flops=2 * (13 * 10 + 10 * 8 + 8 * 1) * n8,
            bytes_accessed=(13 + 1) * 4 * n8,
            transcendentals=0,
        ),
    )(xp, w1p, b1p, w2p, b2p, w3p, b3p)

    # (nr, 8) -> (n8, 1) is a free row-major reshape; drop row padding if any.
    return out.reshape(n8, 1)[:n]


def init_params(key):
    """nn.Linear-style U(-1/sqrt(fan_in), 1/sqrt(fan_in)) init.

    Weights stored as (in_features, out_features); biases as (1, out_features).
    """
    dims = [(13, 10), (10, 8), (8, 1)]
    params = []
    for fan_in, fan_out in dims:
        kw, kb, key = jax.random.split(key, 3)
        bound = 1.0 / np.sqrt(fan_in)
        w = jax.random.uniform(kw, (fan_in, fan_out), jnp.float32, -bound, bound)
        b = jax.random.uniform(kb, (1, fan_out), jnp.float32, -bound, bound)
        params += [w, b]
    return tuple(params)


def reference_forward(x, params, *, cast_dtype=None):
    """Pure-JAX reference. cast_dtype=bf16 mirrors the kernel's bf16-MXU path."""
    w1, b1, w2, b2, w3, b3 = params

    def dot(a, w):
        if cast_dtype is not None:
            a, w = a.astype(cast_dtype), w.astype(cast_dtype)
        return jnp.dot(a, w, preferred_element_type=jnp.float32)

    h1 = jnp.maximum(dot(x, w1) + b1, 0.0)
    h2 = jnp.maximum(dot(h1, w2) + b2, 0.0)
    return dot(h2, w3) + b3


if __name__ == "__main__":
    key = jax.random.PRNGKey(0)
    kx, kx2, kp = jax.random.split(key, 3)
    params = init_params(kp)

    # --- exact-f32 path, small batch (single full-extent block).
    x_small = jax.random.normal(kx, (8, 13), dtype=jnp.float32)
    out_small = jax.block_until_ready(
        my_model_forward(x_small, params, use_bf16_mxu=False))
    assert out_small.shape == (8, 1)
    np.testing.assert_allclose(
        np.asarray(out_small), np.asarray(reference_forward(x_small, params)),
        rtol=1e-5, atol=1e-5)

    # --- exact-f32 path, multi-step grid with a ragged last block; tile_batch=500
    # also exercises the 128/1024-rounding guard for non-aligned tile requests.
    x_big = jax.random.normal(kx2, (1000, 13), dtype=jnp.float32)
    out_f32 = jax.block_until_ready(
        my_model_forward(x_big, params, tile_batch=500, use_bf16_mxu=False))
    assert out_f32.shape == (1000, 1)
    np.testing.assert_allclose(
        np.asarray(out_f32), np.asarray(reference_forward(x_big, params)),
        rtol=1e-5, atol=1e-5)

    # --- default fast path (bf16 MXU operands, f32 accumulation).
    out_bf16 = jax.block_until_ready(
        my_model_forward(x_big, params, tile_batch=256))
    assert out_bf16.shape == (1000, 1)
    # Tight check against a reference with matching (bf16-operand) precision.
    np.testing.assert_allclose(
        np.asarray(out_bf16),
        np.asarray(reference_forward(x_big, params, cast_dtype=jnp.bfloat16)),
        rtol=1e-4, atol=1e-5)
    # Loose sanity check against the full-f32 reference (bf16 rounding noise).
    np.testing.assert_allclose(
        np.asarray(out_bf16), np.asarray(reference_forward(x_big, params)),
        rtol=0.1, atol=0.05)

    print("KERNEL_OK")
</pallas_src>

<mosaic_0001>
module attributes {stable_mosaic.version = 11 : i64} {
  func.func @_mlp_kernel(%arg0: i32, %arg1: memref<1x104xf32, #tpu.memory_space<vmem>>, %arg2: memref<104x80xf32, #tpu.memory_space<vmem>>, %arg3: memref<1x80xf32, #tpu.memory_space<vmem>>, %arg4: memref<80x64xf32, #tpu.memory_space<vmem>>, %arg5: memref<1x64xf32, #tpu.memory_space<vmem>>, %arg6: memref<64x8xf32, #tpu.memory_space<vmem>>, %arg7: memref<1x8xf32, #tpu.memory_space<vmem>>, %arg8: memref<1x8xf32, #tpu.memory_space<vmem>>) attributes {dimension_semantics = [#tpu.dimension_semantics<parallel>], iteration_bounds = array<i64: 1>, scalar_prefetch = 0 : i64, scratch_operands = 0 : i64, tpu.core_type = #tpu.core_type<tc>, window_params = [{transform_indices = @transform_0, window_bounds = array<i64: 1, 104>}, {pipeline_mode = #tpu.pipeline_mode<synchronous>, transform_indices = @transform_1, window_bounds = array<i64: 104, 80>}, {pipeline_mode = #tpu.pipeline_mode<synchronous>, transform_indices = @transform_2, window_bounds = array<i64: 1, 80>}, {pipeline_mode = #tpu.pipeline_mode<synchronous>, transform_indices = @transform_3, window_bounds = array<i64: 80, 64>}, {pipeline_mode = #tpu.pipeline_mode<synchronous>, transform_indices = @transform_4, window_bounds = array<i64: 1, 64>}, {pipeline_mode = #tpu.pipeline_mode<synchronous>, transform_indices = @transform_5, window_bounds = array<i64: 64, 8>}, {pipeline_mode = #tpu.pipeline_mode<synchronous>, transform_indices = @transform_6, window_bounds = array<i64: 1, 8>}, {transform_indices = @transform_7, window_bounds = array<i64: 1, 8>}]} {
    %c0 = arith.constant 0 : index
    %c0_0 = arith.constant 0 : index
    %0 = vector.load %arg1[%c0, %c0_0] : memref<1x104xf32, #tpu.memory_space<vmem>>, vector<1x104xf32>
    %c0_1 = arith.constant 0 : index
    %c0_2 = arith.constant 0 : index
    %1 = vector.load %arg2[%c0_1, %c0_2] : memref<104x80xf32, #tpu.memory_space<vmem>>, vector<104x80xf32>
    %cst = arith.constant dense<0.000000e+00> : vector<1x80xf32>
    %2 = tpu.matmul %0, %1, %cst {dimension_numbers = #tpu.dot_dimension_numbers<[1], [0], [0], [1], [0, 0, 1, 1], [], []>} : vector<1x104xf32>, vector<104x80xf32>, vector<1x80xf32> -> vector<1x80xf32>
    %c0_3 = arith.constant 0 : index
    %c0_4 = arith.constant 0 : index
    %3 = vector.load %arg3[%c0_3, %c0_4] : memref<1x80xf32, #tpu.memory_space<vmem>>, vector<1x80xf32>
    %4 = arith.addf %2, %3 : vector<1x80xf32>
    %cst_5 = arith.constant 0.000000e+00 : f32
    %5 = vector.broadcast %cst_5 : f32 to vector<1x80xf32>
    %6 = arith.maximumf %4, %5 : vector<1x80xf32>
    %c0_6 = arith.constant 0 : index
    %c0_7 = arith.constant 0 : index
    %7 = vector.load %arg4[%c0_6, %c0_7] : memref<80x64xf32, #tpu.memory_space<vmem>>, vector<80x64xf32>
    %cst_8 = arith.constant dense<0.000000e+00> : vector<1x64xf32>
    %8 = tpu.matmul %6, %7, %cst_8 {dimension_numbers = #tpu.dot_dimension_numbers<[1], [0], [0], [1], [0, 0, 1, 1], [], []>} : vector<1x80xf32>, vector<80x64xf32>, vector<1x64xf32> -> vector<1x64xf32>
    %c0_9 = arith.constant 0 : index
    %c0_10 = arith.constant 0 : index
    %9 = vector.load %arg5[%c0_9, %c0_10] : memref<1x64xf32, #tpu.memory_space<vmem>>, vector<1x64xf32>
    %10 = arith.addf %8, %9 : vector<1x64xf32>
    %cst_11 = arith.constant 0.000000e+00 : f32
    %11 = vector.broadcast %cst_11 : f32 to vector<1x64xf32>
    %12 = arith.maximumf %10, %11 : vector<1x64xf32>
    %c0_12 = arith.constant 0 : index
    %c0_13 = arith.constant 0 : index
    %13 = vector.load %arg6[%c0_12, %c0_13] : memref<64x8xf32, #tpu.memory_space<vmem>>, vector<64x8xf32>
    %cst_14 = arith.constant dense<0.000000e+00> : vector<1x8xf32>
    %14 = tpu.matmul %12, %13, %cst_14 {dimension_numbers = #tpu.dot_dimension_numbers<[1], [0], [0], [1], [0, 0, 1, 1], [], []>} : vector<1x64xf32>, vector<64x8xf32>, vector<1x8xf32> -> vector<1x8xf32>
    %c0_15 = arith.constant 0 : index
    %c0_16 = arith.constant 0 : index
    %15 = vector.load %arg7[%c0_15, %c0_16] : memref<1x8xf32, #tpu.memory_space<vmem>>, vector<1x8xf32>
    %16 = arith.addf %14, %15 : vector<1x8xf32>
    %c0_17 = arith.constant 0 : index
    %c0_18 = arith.constant 0 : index
    %17 = vector.load %arg8[%c0_17, %c0_18] : memref<1x8xf32, #tpu.memory_space<vmem>>, vector<1x8xf32>
    tpu.vector_store %arg8[%c0_17, %c0_18], %16 {strides = array<i32>} : memref<1x8xf32, #tpu.memory_space<vmem>>, vector<1x8xf32>,
    return
  }
  func.func @transform_0(%arg0: i32) -> (i32, i32) {
    %c0_i32 = arith.constant 0 : i32
    %c0_i32_0 = arith.constant 0 : i32
    return %arg0, %c0_i32 : i32, i32
  }
  func.func @transform_1(%arg0: i32) -> (i32, i32) {
    %c0_i32 = arith.constant 0 : i32
    %c0_i32_0 = arith.constant 0 : i32
    %c0_i32_1 = arith.constant 0 : i32
    return %c0_i32, %c0_i32_0 : i32, i32
  }
  func.func @transform_2(%arg0: i32) -> (i32, i32) {
    %c0_i32 = arith.constant 0 : i32
    %c0_i32_0 = arith.constant 0 : i32
    %c0_i32_1 = arith.constant 0 : i32
    return %c0_i32, %c0_i32_0 : i32, i32
  }
  func.func @transform_3(%arg0: i32) -> (i32, i32) {
    %c0_i32 = arith.constant 0 : i32
    %c0_i32_0 = arith.constant 0 : i32
    %c0_i32_1 = arith.constant 0 : i32
    return %c0_i32, %c0_i32_0 : i32, i32
  }
  func.func @transform_4(%arg0: i32) -> (i32, i32) {
    %c0_i32 = arith.constant 0 : i32
    %c0_i32_0 = arith.constant 0 : i32
    %c0_i32_1 = arith.constant 0 : i32
    return %c0_i32, %c0_i32_0 : i32, i32
  }
  func.func @transform_5(%arg0: i32) -> (i32, i32) {
    %c0_i32 = arith.constant 0 : i32
    %c0_i32_0 = arith.constant 0 : i32
    %c0_i32_1 = arith.constant 0 : i32
    return %c0_i32, %c0_i32_0 : i32, i32
  }
  func.func @transform_6(%arg0: i32) -> (i32, i32) {
    %c0_i32 = arith.constant 0 : i32
    %c0_i32_0 = arith.constant 0 : i32
    %c0_i32_1 = arith.constant 0 : i32
    return %c0_i32, %c0_i32_0 : i32, i32
  }
  func.func @transform_7(%arg0: i32) -> (i32, i32) {
    %c0_i32 = arith.constant 0 : i32
    %c0_i32_0 = arith.constant 0 : i32
    return %arg0, %c0_i32 : i32, i32
  }
}

</mosaic_0001>

<llo_original>
// kernel: my_model_forward.1
$region0: #{my_model_forward.1}
  #allocation0 [shape = 'u32[]', space=smem, size = 0x4, offset = 0x4, fixed_abs, tag = 'smem constant byte address 0x4 - core index']
  #allocation1 [shape = 'u32[144,128]{1,0:T(1,128)}', space=vmem, size = 0x12000, scoped, tag = 'internal scratch']
  %s0 = inlined_call_operand.vmem [shape: f32[1,104], index: 0, kind: input, shape index: {}]
  %s1 = inlined_call_operand.vmem [shape: f32[104,80], index: 1, kind: input, shape index: {}]
  %s2 = inlined_call_operand.vmem [shape: f32[1,80], index: 2, kind: input, shape index: {}]
  %s3 = inlined_call_operand.vmem [shape: f32[80,64], index: 3, kind: input, shape index: {}]
  %s4 = inlined_call_operand.vmem [shape: f32[1,64], index: 4, kind: input, shape index: {}]
  %s5 = inlined_call_operand.vmem [shape: f32[64,8], index: 5, kind: input, shape index: {}]
  %s6 = inlined_call_operand.vmem [shape: f32[1,8], index: 6, kind: input, shape index: {}]
  %s7 = inlined_call_operand.hbm [shape: f32[1,8], index: 7, kind: output, shape index: {}]
  %s8 = sld [smem:[#allocation0]]
  $region38: #{my_model_forward.1} parent=0
    _
  %s10 = ssub.s32 1, %s8
  %s11 = scalar_select 0, %s10, %s8
  $region1: #{my_model_forward.1} parent=0
    #allocation2 [shape = 'u8[512]{0}', space=vmem, size = 0x400, scoped, tag = 'output window, operand 0, single buffered']
    #allocation3 [shape = 's32[1]{0}', space=sflag, size = 0x4, scoped, tag = 'scoped memory for my_model_forward.1']
    %12 = vsyncpa [#allocation3], 0
    // Predicated region
    $region2: #{my_model_forward.1} parent=1 // pred_check
      _
    $region3: #{my_model_forward.1} parent=1 // pred_check_branch
      %14 = sbr.rel (0) target = $region5
    $region4: #{my_model_forward.1} parent=1 // pred_region
      _
    $region5: #{my_model_forward.1} parent=1 // pred_fallthru
      _
    // Predicated region
    $region6: #{my_model_forward.1} parent=1 // pred_check
      _
    $region7: #{my_model_forward.1} parent=1 // pred_check_branch
      %16 = sbr.rel (0) target = $region9
    $region8: #{my_model_forward.1} parent=1 // pred_region
      _
    $region9: #{my_model_forward.1} parent=1 // pred_fallthru
      _
    // Predicated region
    $region10: #{my_model_forward.1} parent=1 // pred_check
      _
    $region11: #{my_model_forward.1} parent=1 // pred_check_branch
      %18 = sbr.rel (0) target = $region13
    $region12: #{my_model_forward.1} parent=1 // pred_region
      _
    $region13: #{my_model_forward.1} parent=1 // pred_fallthru
      _
    // Predicated region
    $region14: #{my_model_forward.1} parent=1 // pred_check
      _
    $region15: #{my_model_forward.1} parent=1 // pred_check_branch
      %20 = sbr.rel (0) target = $region17
    $region16: #{my_model_forward.1} parent=1 // pred_region
      _
    $region17: #{my_model_forward.1} parent=1 // pred_fallthru
      _
    // Predicated region
    $region18: #{my_model_forward.1} parent=1 // pred_check
      _
    $region19: #{my_model_forward.1} parent=1 // pred_check_branch
      %22 = sbr.rel (0) target = $region21
    $region20: #{my_model_forward.1} parent=1 // pred_region
      _
    $region21: #{my_model_forward.1} parent=1 // pred_fallthru
      _
    // Predicated region
    $region22: #{my_model_forward.1} parent=1 // pred_check
      _
    $region23: #{my_model_forward.1} parent=1 // pred_check_branch
      %24 = sbr.rel (0) target = $region25
    $region24: #{my_model_forward.1} parent=1 // pred_region
      _
    $region25: #{my_model_forward.1} parent=1 // pred_fallthru
      _
    // Predicated region
    $region26: #{my_model_forward.1} parent=1 // pred_check
      _
    $region27: #{my_model_forward.1} parent=1 // pred_check_branch
      %26 = sbr.rel (0) target = $region29
    $region28: #{my_model_forward.1} parent=1 // pred_region
      _
    $region29: #{my_model_forward.1} parent=1 // pred_fallthru
      _
    %v27 = vld [vmem:[%s0] sm:$0x1]
    %v28 = vld [vmem:[%s1] sm:$0xff]
    %v29 = vld [vmem:[%s1 + $0x8] sm:$0xff]
    %v30 = vld [vmem:[%s1 + $0x10] sm:$0xff]
    %v31 = vld [vmem:[%s1 + $0x18] sm:$0xff]
    %v32 = vld [vmem:[%s1 + $0x20] sm:$0xff]
    %v33 = vld [vmem:[%s1 + $0x28] sm:$0xff]
    %v34 = vld [vmem:[%s1 + $0x30] sm:$0xff]
    %v35 = vld [vmem:[%s1 + $0x38] sm:$0xff]
    %v36 = vld [vmem:[%s1 + $0x40] sm:$0xff]
    %v37 = vld [vmem:[%s1 + $0x48] sm:$0xff]
    %v38 = vld [vmem:[%s1 + $0x50] sm:$0xff]
    %v39 = vld [vmem:[%s1 + $0x58] sm:$0xff]
    %v40 = vld [vmem:[%s1 + $0x60] sm:$0xff]
    %v41 = vld [vmem:[%s2] sm:$0x1]
    %vm42 = vcmask 850944
    %v44 = vsel %vm42, %v27, 0
    %46 = vmatprep.subr.mxu0 0.0
    %47 = vmatpush1.msra.mxu0 %v28
    %48 = vmatprep.subr.mxu0 0.0
    %49 = vmatpush1.msra.mxu0 %v29
    %50 = vmatprep.subr.mxu0 0.0
    %51 = vmatpush1.msra.mxu0 %v30
    %52 = vmatprep.subr.mxu0 0.0
    %53 = vmatpush1.msra.mxu0 %v31
    %54 = vmatprep.subr.mxu0 0.0
    %55 = vmatpush1.msra.mxu0 %v32
    %56 = vmatprep.subr.mxu0 0.0
    %57 = vmatpush1.msra.mxu0 %v33
    %58 = vmatprep.subr.mxu0 0.0
    %59 = vmatpush1.msra.mxu0 %v34
    %60 = vmatprep.subr.mxu0 0.0
    %61 = vmatpush1.msra.mxu0 %v35
    %62 = vmatprep.subr.mxu0 0.0
    %63 = vmatpush1.msra.mxu0 %v36
    %64 = vmatprep.subr.mxu0 0.0
    %65 = vmatpush1.msra.mxu0 %v37
    %66 = vmatprep.subr.mxu0 0.0
    %67 = vmatpush1.msra.mxu0 %v38
    %68 = vmatprep.subr.mxu0 0.0
    %69 = vmatpush1.msra.mxu0 %v39
    %70 = vmatprep.subr.mxu0 0.0
    %71 = vmatpush1.msra.mxu0 %v40
    %72 = vmatprep.subr.mxu0 0.0
    %73 = vmatpush1.msra.mxu0 0.0
    %74 = vmatprep.subr.mxu0 0.0
    %75 = vmatpush1.msra.mxu0 0.0
    %76 = vmatprep.subr.mxu0 0.0
    %77 = vmatpush1.msra.mxu0 0.0
    %78 = vmatprep.subr.mxu0 0.0
    %79 = vmatpush1.msra.mxu0 0.0
    %80 = vmatprep.subr.mxu0 0.0
    %81 = vmatpush1.msra.mxu0 0.0
    %82 = vmatprep.subr.mxu0 0.0
    %83 = vmatpush1.msra.mxu0 0.0
    %84 = vmatprep.subr.mxu0 0.0
    %85 = vmatpush1.msra.mxu0 0.0
    %86 = vmatprep.subr.mxu0 0.0
    %87 = vmatpush1.msra.mxu0 0.0
    %88 = vmatprep.subr.mxu0 0.0
    %89 = vmatpush1.msra.mxu0 0.0
    %90 = vmatprep.subr.mxu0 0.0
    %91 = vmatpush1.msra.mxu0 0.0
    %92 = vmatprep.subr.mxu0 0.0
    %93 = vmatpush1.msra.mxu0 0.0
    %94 = vmatprep.subr.mxu0 0.0
    %95 = vmatpush1.msra.mxu0 0.0
    %96 = vmatprep.subr.mxu0 0.0
    %97 = vmatpush1.msra.mxu0 0.0
    %98 = vmatprep.subr.mxu0 0.0
    %99 = vmatpush1.msra.mxu0 0.0
    %100 = vmatprep.subr.mxu0 0.0
    %101 = vmatpush1.msra.mxu0 0.0
    %102 = vmatprep.subr.mxu0 0.0
    %103 = vmatpush1.msra.mxu0 0.0
    %104 = vmatprep.subr.mxu0 0.0
    %105 = vmatpush1.msra.mxu0 0.0
    %106 = vmatprep.subr.mxu0 0.0
    %107 = vmatpush1.msra.mxu0 0.0
    %108 = vmatprep.subr.mxu0 0.0
    %109 = vmatpush1.msra.mxu0 0.0
    %110 = vmatprep.mubr.f32.mxu0 0.0
    %111 = vmatmul.mubr.f32.gmra.mrb[0].mxu0 %v44
    %v112 = vpop.f32.mrb[0].mxu0
    %v113 = vadd.f32 %v41, %v112
    %v114 = vpop.f32.mrb[0].mxu0
    %115 = vdwg.mxu0
    %v116 = vmax.f32 %v113, 0.0
    %v117 = vld [vmem:[%s3] sm:$0xff]
    %v118 = vld [vmem:[%s3 + $0x8] sm:$0xff]
    %v119 = vld [vmem:[%s3 + $0x10] sm:$0xff]
    %v120 = vld [vmem:[%s3 + $0x18] sm:$0xff]
    %v121 = vld [vmem:[%s3 + $0x20] sm:$0xff]
    %v122 = vld [vmem:[%s3 + $0x28] sm:$0xff]
    %v123 = vld [vmem:[%s3 + $0x30] sm:$0xff]
    %v124 = vld [vmem:[%s3 + $0x38] sm:$0xff]
    %v125 = vld [vmem:[%s3 + $0x40] sm:$0xff]
    %v126 = vld [vmem:[%s3 + $0x48] sm:$0xff]
    %v127 = vld [vmem:[%s4] sm:$0x1]
    %vm128 = vcmask 654336
    %v130 = vsel %vm128, %v116, 0
    %132 = vmatprep.subr.mxu0 0.0
    %133 = vmatpush1.msra.mxu0 %v117
    %134 = vmatprep.subr.mxu0 0.0
    %135 = vmatpush1.msra.mxu0 %v118
    %136 = vmatprep.subr.mxu0 0.0
    %137 = vmatpush1.msra.mxu0 %v119
    %138 = vmatprep.subr.mxu0 0.0
    %139 = vmatpush1.msra.mxu0 %v120
    %140 = vmatprep.subr.mxu0 0.0
    %141 = vmatpush1.msra.mxu0 %v121
    %142 = vmatprep.subr.mxu0 0.0
    %143 = vmatpush1.msra.mxu0 %v122
    %144 = vmatprep.subr.mxu0 0.0
    %145 = vmatpush1.msra.mxu0 %v123
    %146 = vmatprep.subr.mxu0 0.0
    %147 = vmatpush1.msra.mxu0 %v124
    %148 = vmatprep.subr.mxu0 0.0
    %149 = vmatpush1.msra.mxu0 %v125
    %150 = vmatprep.subr.mxu0 0.0
    %151 = vmatpush1.msra.mxu0 %v126
    %152 = vmatprep.subr.mxu0 0.0
    %153 = vmatpush1.msra.mxu0 0.0
    %154 = vmatprep.subr.mxu0 0.0
    %155 = vmatpush1.msra.mxu0 0.0
    %156 = vmatprep.subr.mxu0 0.0
    %157 = vmatpush1.msra.mxu0 0.0
    %158 = vmatprep.subr.mxu0 0.0
    %159 = vmatpush1.msra.mxu0 0.0
    %160 = vmatprep.subr.mxu0 0.0
    %161 = vmatpush1.msra.mxu0 0.0
    %162 = vmatprep.subr.mxu0 0.0
    %163 = vmatpush1.msra.mxu0 0.0
    %164 = vmatprep.subr.mxu0 0.0
    %165 = vmatpush1.msra.mxu0 0.0
    %166 = vmatprep.subr.mxu0 0.0
    %167 = vmatpush1.msra.mxu0 0.0
    %168 = vmatprep.subr.mxu0 0.0
    %169 = vmatpush1.msra.mxu0 0.0
    %170 = vmatprep.subr.mxu0 0.0
    %171 = vmatpush1.msra.mxu0 0.0
    %172 = vmatprep.subr.mxu0 0.0
    %173 = vmatpush1.msra.mxu0 0.0
    %174 = vmatprep.subr.mxu0 0.0
    %175 = vmatpush1.msra.mxu0 0.0
    %176 = vmatprep.subr.mxu0 0.0
    %177 = vmatpush1.msra.mxu0 0.0
    %178 = vmatprep.subr.mxu0 0.0
    %179 = vmatpush1.msra.mxu0 0.0
    %180 = vmatprep.subr.mxu0 0.0
    %181 = vmatpush1.msra.mxu0 0.0
    %182 = vmatprep.subr.mxu0 0.0
    %183 = vmatpush1.msra.mxu0 0.0
    %184 = vmatprep.subr.mxu0 0.0
    %185 = vmatpush1.msra.mxu0 0.0
    %186 = vmatprep.subr.mxu0 0.0
    %187 = vmatpush1.msra.mxu0 0.0
    %188 = vmatprep.subr.mxu0 0.0
    %189 = vmatpush1.msra.mxu0 0.0
    %190 = vmatprep.subr.mxu0 0.0
    %191 = vmatpush1.msra.mxu0 0.0
    %192 = vmatprep.subr.mxu0 0.0
    %193 = vmatpush1.msra.mxu0 0.0
    %194 = vmatprep.subr.mxu0 0.0
    %195 = vmatpush1.msra.mxu0 0.0
    %196 = vmatprep.mubr.f32.mxu0 0.0
    %197 = vmatmul.mubr.f32.gmra.mrb[0].mxu0 %v130
    %v198 = vpop.f32.mrb[0].mxu0
    %v199 = vadd.f32 %v127, %v198
    %v200 = vpop.f32.mrb[0].mxu0
    %201 = vdwg.mxu0
    %v202 = vmax.f32 %v199, 0.0
    %v203 = vld [vmem:[%s5] sm:$0xff]
    %v204 = vld [vmem:[%s5 + $0x8] sm:$0xff]
    %v205 = vld [vmem:[%s5 + $0x10] sm:$0xff]
    %v206 = vld [vmem:[%s5 + $0x18] sm:$0xff]
    %v207 = vld [vmem:[%s5 + $0x20] sm:$0xff]
    %v208 = vld [vmem:[%s5 + $0x28] sm:$0xff]
    %v209 = vld [vmem:[%s5 + $0x30] sm:$0xff]
    %v210 = vld [vmem:[%s5 + $0x38] sm:$0xff]
    %v211 = vld [vmem:[%s6] sm:$0x1]
    %vm212 = vcmask 523264
    %v214 = vsel %vm212, %v202, 0
    %216 = vmatprep.subr.mxu0 0.0
    %217 = vmatpush1.msra.mxu0 %v203
    %218 = vmatprep.subr.mxu0 0.0
    %219 = vmatpush1.msra.mxu0 %v204
    %220 = vmatprep.subr.mxu0 0.0
    %221 = vmatpush1.msra.mxu0 %v205
    %222 = vmatprep.subr.mxu0 0.0
    %223 = vmatpush1.msra.mxu0 %v206
    %224 = vmatprep.subr.mxu0 0.0
    %225 = vmatpush1.msra.mxu0 %v207
    %226 = vmatprep.subr.mxu0 0.0
    %227 = vmatpush1.msra.mxu0 %v208
    %228 = vmatprep.subr.mxu0 0.0
    %229 = vmatpush1.msra.mxu0 %v209
    %230 = vmatprep.subr.mxu0 0.0
    %231 = vmatpush1.msra.mxu0 %v210
    %232 = vmatprep.subr.mxu0 0.0
    %233 = vmatpush1.msra.mxu0 0.0
    %234 = vmatprep.subr.mxu0 0.0
    %235 = vmatpush1.msra.mxu0 0.0
    %236 = vmatprep.subr.mxu0 0.0
    %237 = vmatpush1.msra.mxu0 0.0
    %238 = vmatprep.subr.mxu0 0.0
    %239 = vmatpush1.msra.mxu0 0.0
    %240 = vmatprep.subr.mxu0 0.0
    %241 = vmatpush1.msra.mxu0 0.0
    %242 = vmatprep.subr.mxu0 0.0
    %243 = vmatpush1.msra.mxu0 0.0
    %244 = vmatprep.subr.mxu0 0.0
    %245 = vmatpush1.msra.mxu0 0.0
    %246 = vmatprep.subr.mxu0 0.0
    %247 = vmatpush1.msra.mxu0 0.0
    %248 = vmatprep.subr.mxu0 0.0
    %249 = vmatpush1.msra.mxu0 0.0
    %250 = vmatprep.subr.mxu0 0.0
    %251 = vmatpush1.msra.mxu0 0.0
    %252 = vmatprep.subr.mxu0 0.0
    %253 = vmatpush1.msra.mxu0 0.0
    %254 = vmatprep.subr.mxu0 0.0
    %255 = vmatpush1.msra.mxu0 0.0
    %256 = vmatprep.subr.mxu0 0.0
    %257 = vmatpush1.msra.mxu0 0.0
    %258 = vmatprep.subr.mxu0 0.0
    %259 = vmatpush1.msra.mxu0 0.0
    %260 = vmatprep.subr.mxu0 0.0
    %261 = vmatpush1.msra.mxu0 0.0
    %262 = vmatprep.subr.mxu0 0.0
    %263 = vmatpush1.msra.mxu0 0.0
    %264 = vmatprep.subr.mxu0 0.0
    %265 = vmatpush1.msra.mxu0 0.0
    %266 = vmatprep.subr.mxu0 0.0
    %267 = vmatpush1.msra.mxu0 0.0
    %268 = vmatprep.subr.mxu0 0.0
    %269 = vmatpush1.msra.mxu0 0.0
    %270 = vmatprep.subr.mxu0 0.0
    %271 = vmatpush1.msra.mxu0 0.0
    %272 = vmatprep.subr.mxu0 0.0
    %273 = vmatpush1.msra.mxu0 0.0
    %274 = vmatprep.subr.mxu0 0.0
    %275 = vmatpush1.msra.mxu0 0.0
    %276 = vmatprep.subr.mxu0 0.0
    %277 = vmatpush1.msra.mxu0 0.0
    %278 = vmatprep.subr.mxu0 0.0
    %279 = vmatpush1.msra.mxu0 0.0
    %280 = vmatprep.mubr.f32.mxu0 0.0
    %281 = vmatmul.mubr.f32.gmra.mrb[0].mxu0 %v214
    %v282 = vpop.f32.mrb[0].mxu0
    %v283 = vadd.f32 %v211, %v282
    %v284 = vpop.f32.mrb[0].mxu0
    %285 = vdwg.mxu0
    %vm286 = vcmask 57344
    %287 = vst.msk [vmem:[#allocation2] sm:$0x1] %vm286, %v283
    // Predicated region
    $region30: #{my_model_forward.1} parent=1 // pred_check
      _
    $region31: #{my_model_forward.1} parent=1 // pred_check_branch
      %289 = sbr.rel (0) target = $region33
    $region32: #{my_model_forward.1} parent=1 // pred_region
      %s291 = ssub.s32 16, 16
      %292 = vsyncadd [#allocation3], %s291
      %s294 = sshll.u32 [#allocation2], 4
      %s295 = int_to_ptr.vmem [resolvable:$true] %s294
      %297 = dma.vmem_to_hbm [thread:$0]  %s295, 16, %s7, [#allocation3]
    $region33: #{my_model_forward.1} parent=1 // pred_fallthru
      _
    // Predicated region
    $region34: #{my_model_forward.1} parent=1 // pred_check
      _
    $region35: #{my_model_forward.1} parent=1 // pred_check_branch
      %299 = sbr.rel (0) target = $region37
    $region36: #{my_model_forward.1} parent=1 // pred_region
      %300 = dma.done [#allocation3], 16
    $region37: #{my_model_forward.1} parent=1 // pred_fallthru
      _
    %301 = vsyncpa [#allocation3], 1

</llo_original>
